<compile_context>
chip_gen: v5e
topology: v5e:2x2
jax: 0.10.0
libtpu: 0.0.40
codegen_flags: <defaults>
</compile_context>

<pallas_src>
import jax
import jax.numpy as jnp
from jax.experimental import pallas as pl
from jax.experimental.pallas import tpu as pltpu


def _net_kernel(params_ref, x_ref, o_ref):
    # params_ref: SMEM (3,) f32 = [w0, w1, b]
    # x_ref:      VMEM (2, TB)  -- batch along lanes
    # o_ref:      VMEM (1, TB)
    w0 = params_ref[0]
    w1 = params_ref[1]
    b = params_ref[2]

    x0 = x_ref[0:1, :]                      # (1, TB), lane-dense
    x1 = x_ref[1:2, :]                      # (1, TB)

    y = x0 * w0 + x1 * w1 + b               # pure VPU (vmul/vadd), no MXU
    o_ref[...] = jnp.maximum(y, 0.0).astype(o_ref.dtype)


def net_forward(x, weight, bias, *, block_b=1024):
    """Forward of Net.

    x:      (B, 2) float32
    weight: (1, 2) float32 (PyTorch nn.Linear layout: (out_features, in_features))
    bias:   (1,)   float32
    returns (B, 1) float32
    """
    x = x.astype(jnp.float32)
    B = x.shape[0]

    lane = 128
    # Tile width along batch: multiple of 128 lanes, no larger than needed.
    tb = max(lane, min(block_b, pl.cdiv(B, lane) * lane))
    Bp = pl.cdiv(B, tb) * tb                 # padded batch, multiple of tb

    # Batch onto the lane axis (layout plumbing done on the XLA side).
    x_t = x.T                                # (2, B)
    if Bp != B:
        x_t = jnp.pad(x_t, ((0, 0), (0, Bp - B)))

    # Pack the 3 scalar parameters for SMEM: [w0, w1, b].
    params = jnp.concatenate(
        [weight.reshape(-1), bias.reshape(-1)]).astype(jnp.float32)

    out = pl.pallas_call(
        _net_kernel,
        out_shape=jax.ShapeDtypeStruct((1, Bp), jnp.float32),
        grid_spec=pltpu.PrefetchScalarGridSpec(
            num_scalar_prefetch=0,
            grid=(Bp // tb,),
            in_specs=[
                # weight/bias: whole (3,) array lives in SMEM, no VMEM tile.
                pl.BlockSpec(memory_space=pltpu.MemorySpace.SMEM),
                # x: (2, TB) blocks marching along the lane (batch) axis.
                pl.BlockSpec((2, tb), lambda i: (0, i)),
            ],
            out_specs=pl.BlockSpec((1, tb), lambda i: (0, i)),
        ),
        compiler_params=pltpu.CompilerParams(
            # Batch axis is embarrassingly parallel (v7x megacore sharding).
            dimension_semantics=("parallel",),
        ),
    )(params, x_t)

    # Back to the PyTorch-visible (B, 1) layout, dropping padding.
    return out[0, :B].reshape(B, 1)


if __name__ == "__main__":
    key = jax.random.PRNGKey(0)
    kx, kw, kb = jax.random.split(key, 3)

    # Deterministic parameters (mimics nn.Linear uniform(-1/sqrt(2), 1/sqrt(2))).
    bound = 1.0 / jnp.sqrt(2.0)
    weight = jax.random.uniform(kw, (1, 2), minval=-bound, maxval=bound,
                                dtype=jnp.float32)   # (out, in) PyTorch layout
    bias = jax.random.uniform(kb, (1,), minval=-bound, maxval=bound,
                              dtype=jnp.float32)

    # Small batch (matches the toy module) -- single 128-lane tile.
    B = 8
    x = jax.random.normal(kx, (B, 2), dtype=jnp.float32)
    out = jax.block_until_ready(net_forward(x, weight, bias))
    ref = jnp.maximum(x @ weight.T + bias, 0.0)
    assert out.shape == (B, 1)
    assert jnp.allclose(out, ref, atol=1e-5, rtol=1e-5)

    # Larger batch -- exercises multi-step grid (tb=1024, grid=3) + padding.
    B2 = 2500
    x2 = jax.random.normal(kx, (B2, 2), dtype=jnp.float32)
    out2 = jax.block_until_ready(net_forward(x2, weight, bias))
    ref2 = jnp.maximum(x2 @ weight.T + bias, 0.0)
    assert out2.shape == (B2, 1)
    assert jnp.allclose(out2, ref2, atol=1e-5, rtol=1e-5)

    print("KERNEL_OK")
</pallas_src>

<mosaic_0001>
module attributes {stable_mosaic.version = 11 : i64} {
  func.func @_net_kernel(%arg0: i32, %arg1: memref<3xf32, #tpu.memory_space<smem>>, %arg2: memref<2x128xf32, #tpu.memory_space<vmem>>, %arg3: memref<1x128xf32, #tpu.memory_space<vmem>>) attributes {dimension_semantics = [#tpu.dimension_semantics<parallel>], iteration_bounds = array<i64: 1>, scalar_prefetch = 0 : i64, scratch_operands = 0 : i64, tpu.core_type = #tpu.core_type<tc>, window_params = [{transform_indices = @transform_0, window_bounds = array<i64: 3>}, {transform_indices = @transform_1, window_bounds = array<i64: 2, 128>}, {transform_indices = @transform_2, window_bounds = array<i64: 1, 128>}]} {
    %c0 = arith.constant 0 : index
    %0 = memref.load %arg1[%c0] : memref<3xf32, #tpu.memory_space<smem>>
    %c1 = arith.constant 1 : index
    %1 = memref.load %arg1[%c1] : memref<3xf32, #tpu.memory_space<smem>>
    %c2 = arith.constant 2 : index
    %2 = memref.load %arg1[%c2] : memref<3xf32, #tpu.memory_space<smem>>
    %c0_0 = arith.constant 0 : index
    %c0_1 = arith.constant 0 : index
    %3 = vector.load %arg2[%c0_0, %c0_1] : memref<2x128xf32, #tpu.memory_space<vmem>>, vector<1x128xf32>
    %c1_2 = arith.constant 1 : index
    %c0_3 = arith.constant 0 : index
    %4 = vector.load %arg2[%c1_2, %c0_3] : memref<2x128xf32, #tpu.memory_space<vmem>>, vector<1x128xf32>
    %5 = vector.broadcast %0 : f32 to vector<1x128xf32>
    %6 = arith.mulf %3, %5 : vector<1x128xf32>
    %7 = vector.broadcast %1 : f32 to vector<1x128xf32>
    %8 = arith.mulf %4, %7 : vector<1x128xf32>
    %9 = arith.addf %6, %8 : vector<1x128xf32>
    %10 = vector.broadcast %2 : f32 to vector<1x128xf32>
    %11 = arith.addf %9, %10 : vector<1x128xf32>
    %cst = arith.constant 0.000000e+00 : f32
    %12 = vector.broadcast %cst : f32 to vector<1x128xf32>
    %13 = arith.maximumf %11, %12 : vector<1x128xf32>
    %c0_4 = arith.constant 0 : index
    %c0_5 = arith.constant 0 : index
    %14 = vector.load %arg3[%c0_4, %c0_5] : memref<1x128xf32, #tpu.memory_space<vmem>>, vector<1x128xf32>
    tpu.vector_store %arg3[%c0_4, %c0_5], %13 {strides = array<i32>} : memref<1x128xf32, #tpu.memory_space<vmem>>, vector<1x128xf32>,
    return
  }
  func.func @transform_0(%arg0: i32) -> i32 {
    %c0_i32 = arith.constant 0 : i32
    %c0_i32_0 = arith.constant 0 : i32
    return %c0_i32 : i32
  }
  func.func @transform_1(%arg0: i32) -> (i32, i32) {
    %c0_i32 = arith.constant 0 : i32
    %c0_i32_0 = arith.constant 0 : i32
    return %c0_i32, %arg0 : i32, i32
  }
  func.func @transform_2(%arg0: i32) -> (i32, i32) {
    %c0_i32 = arith.constant 0 : i32
    %c0_i32_0 = arith.constant 0 : i32
    return %c0_i32, %arg0 : i32, i32
  }
}

</mosaic_0001>

<llo_original>
// kernel: tpu_custom_call.1
$region0: #{tpu_custom_call.1}
  #allocation0 [shape = 'u32[]', space=smem, size = 0x4, offset = 0x4, fixed_abs, tag = 'smem constant byte address 0x4 - core index']
  #allocation1 [shape = 'u32[72,128]{1,0:T(1,128)}', space=vmem, size = 0x9000, scoped, tag = 'internal scratch']
  %s0 = inlined_call_operand.hbm [shape: f32[3], index: 0, kind: input, shape index: {}]
  %s1 = inlined_call_operand.hbm [shape: f32[2,128], index: 1, kind: input, shape index: {}]
  %s2 = inlined_call_operand.hbm [shape: f32[1,128], index: 2, kind: output, shape index: {}]
  %s3 = sld [smem:[#allocation0]]
  $region26: #{tpu_custom_call.1} parent=0
    _
  %s5 = ssub.s32 1, %s3
  %s6 = scalar_select 0, %s5, %s3
  $region1: #{tpu_custom_call.1} parent=0
    #allocation2 [shape = 'u8[512]{0}', space=smem, size = 0x200, scoped, tag = 'input window, operand 0, single buffered']
    #allocation3 [shape = 's32[1]{0}', space=sflag, size = 0x4, scoped, tag = 'scoped memory for tpu_custom_call.1']
    #allocation4 [shape = 's32[1]{0}', space=sflag, size = 0x4, scoped, tag = 'scoped memory for tpu_custom_call.1']
    #allocation5 [shape = 's32[1]{0}', space=sflag, size = 0x4, scoped, tag = 'scoped memory for tpu_custom_call.1']
    #allocation6 [shape = 'u8[1024]{0}', space=vmem, size = 0x400, scoped, tag = 'input window, operand 1, single buffered']
    #allocation7 [shape = 'u8[512]{0}', space=vmem, size = 0x400, scoped, tag = 'output window, operand 0, single buffered']
    %7 = vsyncpa [#allocation5], 0
    %8 = vsyncpa [#allocation3], 0
    %9 = vsyncpa [#allocation4], 0
    // Predicated region
    $region2: #{tpu_custom_call.1} parent=1 // pred_check
      _
    $region3: #{tpu_custom_call.1} parent=1 // pred_check_branch
      %11 = sbr.rel (0) target = $region5
    $region4: #{tpu_custom_call.1} parent=1 // pred_region
      %13 = vsyncadd [#allocation5], 0
      %s15 = sshll.u32 %s0, 4
      %s16 = int_to_ptr.hbm [resolvable:$true] %s15
      %18 = dma.hbm_to_smem %s16, 16, [#allocation2], [#allocation5]
    $region5: #{tpu_custom_call.1} parent=1 // pred_fallthru
      _
    // Predicated region
    $region6: #{tpu_custom_call.1} parent=1 // pred_check
      _
    $region7: #{tpu_custom_call.1} parent=1 // pred_check_branch
      %20 = sbr.rel (0) target = $region9
    $region8: #{tpu_custom_call.1} parent=1 // pred_region
      %22 = vsyncadd [#allocation3], 0
      %s24 = sshll.u32 %s1, 4
      %s25 = int_to_ptr.hbm [resolvable:$true] %s24
      %s26 = sshll.u32 [#allocation6], 4
      %s27 = int_to_ptr.vmem [resolvable:$true] %s26
      %29 = dma.hbm_to_vmem [thread:$0]  %s25, 32, %s27, [#allocation3]
    $region9: #{tpu_custom_call.1} parent=1 // pred_fallthru
      _
    // Predicated region
    $region10: #{tpu_custom_call.1} parent=1 // pred_check
      _
    $region11: #{tpu_custom_call.1} parent=1 // pred_check_branch
      %31 = sbr.rel (0) target = $region13
    $region12: #{tpu_custom_call.1} parent=1 // pred_region
      %33 = dma.done [#allocation5], 16
    $region13: #{tpu_custom_call.1} parent=1 // pred_fallthru
      _
    // Predicated region
    $region14: #{tpu_custom_call.1} parent=1 // pred_check
      _
    $region15: #{tpu_custom_call.1} parent=1 // pred_check_branch
      %35 = sbr.rel (0) target = $region17
    $region16: #{tpu_custom_call.1} parent=1 // pred_region
      %37 = dma.done [#allocation3], 32
    $region17: #{tpu_custom_call.1} parent=1 // pred_fallthru
      _
    %38 = sfence
    %s39 = sld [smem:[#allocation2]]
    %s40 = sld [smem:[#allocation2 + $0x1]]
    %s41 = sld [smem:[#allocation2 + $0x2]]
    %v42 = vld [vmem:[#allocation6] sm:$0x1]
    %v43 = vld [vmem:[#allocation6 + $0x1] sm:$0x1]
    %v44 = vstv %s39
    %v45 = vmul.f32 %v42, %v44
    %v46 = vstv %s40
    %v47 = vmul.f32 %v43, %v46
    %v48 = vadd.f32 %v45, %v47
    %v49 = vstv %s41
    %v50 = vadd.f32 %v48, %v49
    %v51 = vmax.f32 %v50, 0.0
    %52 = vst [vmem:[#allocation7] sm:$0x1] %v51
    // Predicated region
    $region18: #{tpu_custom_call.1} parent=1 // pred_check
      _
    $region19: #{tpu_custom_call.1} parent=1 // pred_check_branch
      %54 = sbr.rel (0) target = $region21
    $region20: #{tpu_custom_call.1} parent=1 // pred_region
      %56 = vsyncadd [#allocation4], 0
      %s58 = sshll.u32 [#allocation7], 4
      %s59 = int_to_ptr.vmem [resolvable:$true] %s58
      %s60 = sshll.u32 %s2, 4
      %s61 = int_to_ptr.hbm [resolvable:$true] %s60
      %63 = dma.vmem_to_hbm [thread:$0]  %s59, 16, %s61, [#allocation4]
    $region21: #{tpu_custom_call.1} parent=1 // pred_fallthru
      _
    // Predicated region
    $region22: #{tpu_custom_call.1} parent=1 // pred_check
      _
    $region23: #{tpu_custom_call.1} parent=1 // pred_check_branch
      %65 = sbr.rel (0) target = $region25
    $region24: #{tpu_custom_call.1} parent=1 // pred_region
      %67 = dma.done [#allocation4], 16
    $region25: #{tpu_custom_call.1} parent=1 // pred_fallthru
      _
    %68 = vsyncpa [#allocation3], 1
    %69 = vsyncpa [#allocation4], 1
    %70 = vsyncpa [#allocation5], 1

</llo_original>
